<compile_context>
chip_gen: v7x
topology: tpu7x:2x2x1
jax: 0.10.0
libtpu: 0.0.40
codegen_flags: <defaults>
</compile_context>

<pallas_src>
import functools

import numpy as np
import jax
import jax.numpy as jnp
from jax.experimental import pallas as pl
from jax.experimental.pallas import tpu as pltpu


def _adaptive_pool_matrix(in_size: int, out_size: int) -> np.ndarray:
    """Row-stochastic matrix reproducing torch F.adaptive_avg_pool1d binning."""
    m = np.zeros((out_size, in_size), dtype=np.float32)
    for o in range(out_size):
        start = (o * in_size) // out_size
        end = -(-((o + 1) * in_size) // out_size)  # ceil division
        m[o, start:end] = 1.0 / float(end - start)
    return m


@functools.lru_cache(maxsize=64)
def _psp_matrix(h: int, w: int, grids: tuple):
    """Build M^T (h*w, total_out) once per geometry (cached: numpy build + H2D
    upload happen only once per (h, w, grids))."""
    ar = w / h
    blocks = []
    for g in grids:
        gh = g
        gw = max(1, round(ar * g))               # same Python round() torch uses
        ph = _adaptive_pool_matrix(h, gh)        # (gh, h)
        pw = _adaptive_pool_matrix(w, gw)        # (gw, w)
        # kron gives [oi*gw+oj, i*w+j] = ph[oi,i]*pw[oj,j]
        blocks.append(np.kron(ph, pw))
    m = np.concatenate(blocks, axis=0)           # (total_out, h*w)
    total_out = m.shape[0]
    mt = np.ascontiguousarray(m.T)               # (h*w, total_out), f32
    return jnp.asarray(mt), total_out


def _psp_matmul_kernel(x_ref, mt_ref, o_ref):
    # x_ref : (TM, h*w) VMEM tile (native input dtype)
    # mt_ref: (h*w, total_out) VMEM tile, f32, resident across grid steps
    # o_ref : (TM, total_out) output tile (block last dim == full array dim)
    x = x_ref[...].astype(jnp.float32)
    o_ref[...] = jnp.dot(
        x, mt_ref[...], preferred_element_type=jnp.float32
    ).astype(o_ref.dtype)


def _choose_tm(rows: int, k: int, in_itemsize: int,
               total_out: int, out_itemsize: int) -> int:
    """Largest row tile <= 2048 whose double-buffered VMEM footprint (plus the
    resident M^T) fits a conservative budget valid on v5e / v6e / v7x."""
    budget = 40 * 1024 * 1024  # headroom under v7x's 64 MiB physical VMEM
    mt_bytes = k * total_out * 4

    def vmem(t):
        # 2x X tile (double buffer) + 2x output tile (double buffer) + resident M^T
        return 2 * t * k * in_itemsize + 2 * t * total_out * out_itemsize + mt_bytes

    tm = 2048
    while tm > 8 and vmem(tm) > budget:
        tm //= 2
    if rows <= tm:
        return rows          # single block: block dim == full array dim is legal
    return tm                # partial last block (if any) is masked by Pallas


def psp_module(feats: jax.Array, grids=(1, 3, 6, 8)) -> jax.Array:
    """JAX/Pallas equivalent of PSPModule.forward (assumes channels == c)."""
    b, c, h, w = feats.shape
    mt, total_out = _psp_matrix(h, w, tuple(grids))  # (h*w, total_out), cached
    k = h * w
    rows = b * c

    x_flat = feats.reshape(rows, k)              # keep native dtype (no f32 upcast)
    in_itemsize = x_flat.dtype.itemsize
    out_dtype = feats.dtype
    out_itemsize = jnp.dtype(out_dtype).itemsize

    tm = _choose_tm(rows, k, in_itemsize, total_out, out_itemsize)
    grid = (pl.cdiv(rows, tm),)

    mt_bytes = k * total_out * 4
    vmem_need = (2 * tm * k * in_itemsize
                 + 2 * tm * total_out * out_itemsize
                 + 2 * mt_bytes)
    vmem_limit = int(min(60 * 1024 * 1024,
                         max(32 * 1024 * 1024, int(vmem_need * 1.25))))

    out = pl.pallas_call(
        _psp_matmul_kernel,
        out_shape=jax.ShapeDtypeStruct((rows, total_out), out_dtype),
        grid=grid,
        in_specs=[
            pl.BlockSpec((tm, k), lambda i: (i, 0)),          # row-tiled X
            pl.BlockSpec((k, total_out), lambda i: (0, 0)),   # M^T resident
        ],
        out_specs=pl.BlockSpec((tm, total_out), lambda i: (i, 0)),
        compiler_params=pltpu.CompilerParams(
            dimension_semantics=("parallel",),                # shards rows on v7x's 2 TCs
            vmem_limit_bytes=vmem_limit,
        ),
        cost_estimate=pl.CostEstimate(
            flops=2 * rows * k * total_out,
            bytes_accessed=(rows * k * in_itemsize
                            + mt_bytes
                            + rows * total_out * out_itemsize),
            transcendentals=0,
        ),
    )(x_flat, mt)

    # TODO(synk): if h*w grows beyond ~8192 (e.g. 128x128 maps), add a K-tiled
    # reduction axis with a VMEM f32 accumulator so X tiles stay inside v7x VMEM.
    return out.reshape(b, c, total_out)


def _reference(feats: jax.Array, grids=(1, 3, 6, 8)) -> jax.Array:
    b, c, h, w = feats.shape
    mt, total_out = _psp_matrix(h, w, tuple(grids))
    x_flat = feats.reshape(b * c, h * w).astype(jnp.float32)
    return (x_flat @ mt).reshape(b, c, total_out)


if __name__ == "__main__":
    key = jax.random.PRNGKey(0)
    b, c, h, w = 2, 4, 16, 16                 # channels=c so view(b, channels, -1) is valid
    feats = jax.random.normal(key, (b, c, h, w), dtype=jnp.float32)

    out = psp_module(feats, grids=(1, 3, 6, 8))
    out = jax.block_until_ready(out)

    ref = _reference(feats, grids=(1, 3, 6, 8))
    assert out.shape == (b, c, 1 * 1 + 3 * 3 + 6 * 6 + 8 * 8), out.shape
    np.testing.assert_allclose(np.asarray(out), np.asarray(ref), rtol=1e-5, atol=1e-5)

    print("KERNEL_OK")
</pallas_src>

<mosaic_0001>
module attributes {stable_mosaic.version = 11 : i64} {
  func.func @_psp_matmul_kernel(%arg0: i32, %arg1: memref<8x256xf32, #tpu.memory_space<vmem>>, %arg2: memref<256x110xf32, #tpu.memory_space<vmem>>, %arg3: memref<8x110xf32, #tpu.memory_space<vmem>>) attributes {dimension_semantics = [#tpu.dimension_semantics<parallel>], iteration_bounds = array<i64: 1>, scalar_prefetch = 0 : i64, scratch_operands = 0 : i64, tpu.core_type = #tpu.core_type<tc>, window_params = [{transform_indices = @transform_0, window_bounds = array<i64: 8, 256>}, {pipeline_mode = #tpu.pipeline_mode<synchronous>, transform_indices = @transform_1, window_bounds = array<i64: 256, 110>}, {transform_indices = @transform_2, window_bounds = array<i64: 8, 110>}]} {
    %c0 = arith.constant 0 : index
    %c0_0 = arith.constant 0 : index
    %0 = vector.load %arg1[%c0, %c0_0] : memref<8x256xf32, #tpu.memory_space<vmem>>, vector<8x256xf32>
    %c0_1 = arith.constant 0 : index
    %c0_2 = arith.constant 0 : index
    %1 = vector.load %arg2[%c0_1, %c0_2] : memref<256x110xf32, #tpu.memory_space<vmem>>, vector<256x110xf32>
    %cst = arith.constant dense<0.000000e+00> : vector<8x110xf32>
    %2 = tpu.matmul %0, %1, %cst {dimension_numbers = #tpu.dot_dimension_numbers<[1], [0], [0], [1], [0, 0, 1, 1], [], []>} : vector<8x256xf32>, vector<256x110xf32>, vector<8x110xf32> -> vector<8x110xf32>
    %c0_3 = arith.constant 0 : index
    %c0_4 = arith.constant 0 : index
    %3 = vector.load %arg3[%c0_3, %c0_4] : memref<8x110xf32, #tpu.memory_space<vmem>>, vector<8x110xf32>
    tpu.vector_store %arg3[%c0_3, %c0_4], %2 {strides = array<i32>} : memref<8x110xf32, #tpu.memory_space<vmem>>, vector<8x110xf32>,
    return
  }
  func.func @transform_0(%arg0: i32) -> (i32, i32) {
    %c0_i32 = arith.constant 0 : i32
    %c0_i32_0 = arith.constant 0 : i32
    return %arg0, %c0_i32 : i32, i32
  }
  func.func @transform_1(%arg0: i32) -> (i32, i32) {
    %c0_i32 = arith.constant 0 : i32
    %c0_i32_0 = arith.constant 0 : i32
    %c0_i32_1 = arith.constant 0 : i32
    return %c0_i32, %c0_i32_0 : i32, i32
  }
  func.func @transform_2(%arg0: i32) -> (i32, i32) {
    %c0_i32 = arith.constant 0 : i32
    %c0_i32_0 = arith.constant 0 : i32
    return %arg0, %c0_i32 : i32, i32
  }
}

</mosaic_0001>

<llo_original>
// kernel: tpu_custom_call.1
$region0: #{tpu_custom_call.1}
  #allocation0 [shape = 'u32[]', space=smem, size = 0x4, offset = 0x4, fixed_abs, tag = 'smem constant byte address 0x4 - core index']
  #allocation1 [shape = 'u32[144,128]{1,0:T(1,128)}', space=vmem, size = 0x12000, scoped, tag = 'internal scratch']
  %s0 = inlined_call_operand.vmem [shape: f32[8,256], index: 0, kind: input, shape index: {}]
  %s1 = inlined_call_operand.vmem [shape: f32[256,110], index: 1, kind: input, shape index: {}]
  %s2 = inlined_call_operand.hbm [shape: f32[8,110], index: 2, kind: output, shape index: {}]
  %s3 = sld [smem:[#allocation0]]
  $region18: #{tpu_custom_call.1} parent=0
    _
  %s5 = ssub.s32 1, %s3
  %s6 = scalar_select 0, %s5, %s3
  $region1: #{tpu_custom_call.1} parent=0
    #allocation2 [shape = 'u8[4096]{0}', space=vmem, size = 0x1000, scoped, tag = 'output window, operand 0, single buffered']
    #allocation3 [shape = 's32[1]{0}', space=sflag, size = 0x4, scoped, tag = 'scoped memory for tpu_custom_call.1']
    %7 = vsyncpa [#allocation3], 0
    // Predicated region
    $region2: #{tpu_custom_call.1} parent=1 // pred_check
      _
    $region3: #{tpu_custom_call.1} parent=1 // pred_check_branch
      %9 = sbr.rel (0) target = $region5
    $region4: #{tpu_custom_call.1} parent=1 // pred_region
      _
    $region5: #{tpu_custom_call.1} parent=1 // pred_fallthru
      _
    // Predicated region
    $region6: #{tpu_custom_call.1} parent=1 // pred_check
      _
    $region7: #{tpu_custom_call.1} parent=1 // pred_check_branch
      %11 = sbr.rel (0) target = $region9
    $region8: #{tpu_custom_call.1} parent=1 // pred_region
      _
    $region9: #{tpu_custom_call.1} parent=1 // pred_fallthru
      _
    %v12 = vld [vmem:[%s0] sm:$0xff]
    %v13 = vld [vmem:[%s0 + $0x8] sm:$0xff]
    %v14 = vld [vmem:[%s1] sm:$0xff]
    %v15 = vld [vmem:[%s1 + $0x8] sm:$0xff]
    %v16 = vld [vmem:[%s1 + $0x10] sm:$0xff]
    %v17 = vld [vmem:[%s1 + $0x18] sm:$0xff]
    %v18 = vld [vmem:[%s1 + $0x20] sm:$0xff]
    %v19 = vld [vmem:[%s1 + $0x28] sm:$0xff]
    %v20 = vld [vmem:[%s1 + $0x30] sm:$0xff]
    %v21 = vld [vmem:[%s1 + $0x38] sm:$0xff]
    %v22 = vld [vmem:[%s1 + $0x40] sm:$0xff]
    %v23 = vld [vmem:[%s1 + $0x48] sm:$0xff]
    %v24 = vld [vmem:[%s1 + $0x50] sm:$0xff]
    %v25 = vld [vmem:[%s1 + $0x58] sm:$0xff]
    %v26 = vld [vmem:[%s1 + $0x60] sm:$0xff]
    %v27 = vld [vmem:[%s1 + $0x68] sm:$0xff]
    %v28 = vld [vmem:[%s1 + $0x70] sm:$0xff]
    %v29 = vld [vmem:[%s1 + $0x78] sm:$0xff]
    %v30 = vld [vmem:[%s1 + $0x80] sm:$0xff]
    %v31 = vld [vmem:[%s1 + $0x88] sm:$0xff]
    %v32 = vld [vmem:[%s1 + $0x90] sm:$0xff]
    %v33 = vld [vmem:[%s1 + $0x98] sm:$0xff]
    %v34 = vld [vmem:[%s1 + $0xa0] sm:$0xff]
    %v35 = vld [vmem:[%s1 + $0xa8] sm:$0xff]
    %v36 = vld [vmem:[%s1 + $0xb0] sm:$0xff]
    %v37 = vld [vmem:[%s1 + $0xb8] sm:$0xff]
    %v38 = vld [vmem:[%s1 + $0xc0] sm:$0xff]
    %v39 = vld [vmem:[%s1 + $0xc8] sm:$0xff]
    %v40 = vld [vmem:[%s1 + $0xd0] sm:$0xff]
    %v41 = vld [vmem:[%s1 + $0xd8] sm:$0xff]
    %v42 = vld [vmem:[%s1 + $0xe0] sm:$0xff]
    %v43 = vld [vmem:[%s1 + $0xe8] sm:$0xff]
    %v44 = vld [vmem:[%s1 + $0xf0] sm:$0xff]
    %v45 = vld [vmem:[%s1 + $0xf8] sm:$0xff]
    %46 = vmatprep.subr.mxu0 0.0
    %47 = vmatpush1.msra.mxu0 %v14
    %48 = vmatprep.subr.mxu0 0.0
    %49 = vmatpush1.msra.mxu0 %v15
    %50 = vmatprep.subr.mxu0 0.0
    %51 = vmatpush1.msra.mxu0 %v16
    %52 = vmatprep.subr.mxu0 0.0
    %53 = vmatpush1.msra.mxu0 %v17
    %54 = vmatprep.subr.mxu0 0.0
    %55 = vmatpush1.msra.mxu0 %v18
    %56 = vmatprep.subr.mxu0 0.0
    %57 = vmatpush1.msra.mxu0 %v19
    %58 = vmatprep.subr.mxu0 0.0
    %59 = vmatpush1.msra.mxu0 %v20
    %60 = vmatprep.subr.mxu0 0.0
    %61 = vmatpush1.msra.mxu0 %v21
    %62 = vmatprep.subr.mxu0 0.0
    %63 = vmatpush1.msra.mxu0 %v22
    %64 = vmatprep.subr.mxu0 0.0
    %65 = vmatpush1.msra.mxu0 %v23
    %66 = vmatprep.subr.mxu0 0.0
    %67 = vmatpush1.msra.mxu0 %v24
    %68 = vmatprep.subr.mxu0 0.0
    %69 = vmatpush1.msra.mxu0 %v25
    %70 = vmatprep.subr.mxu0 0.0
    %71 = vmatpush1.msra.mxu0 %v26
    %72 = vmatprep.subr.mxu0 0.0
    %73 = vmatpush1.msra.mxu0 %v27
    %74 = vmatprep.subr.mxu0 0.0
    %75 = vmatpush1.msra.mxu0 %v28
    %76 = vmatprep.subr.mxu0 0.0
    %77 = vmatpush1.msra.mxu0 %v29
    %78 = vmatprep.subr.mxu0 0.0
    %79 = vmatpush1.msra.mxu0 %v30
    %80 = vmatprep.subr.mxu0 0.0
    %81 = vmatpush1.msra.mxu0 %v31
    %82 = vmatprep.subr.mxu0 0.0
    %83 = vmatpush1.msra.mxu0 %v32
    %84 = vmatprep.subr.mxu0 0.0
    %85 = vmatpush1.msra.mxu0 %v33
    %86 = vmatprep.subr.mxu0 0.0
    %87 = vmatpush1.msra.mxu0 %v34
    %88 = vmatprep.subr.mxu0 0.0
    %89 = vmatpush1.msra.mxu0 %v35
    %90 = vmatprep.subr.mxu0 0.0
    %91 = vmatpush1.msra.mxu0 %v36
    %92 = vmatprep.subr.mxu0 0.0
    %93 = vmatpush1.msra.mxu0 %v37
    %94 = vmatprep.subr.mxu0 0.0
    %95 = vmatpush1.msra.mxu0 %v38
    %96 = vmatprep.subr.mxu0 0.0
    %97 = vmatpush1.msra.mxu0 %v39
    %98 = vmatprep.subr.mxu0 0.0
    %99 = vmatpush1.msra.mxu0 %v40
    %100 = vmatprep.subr.mxu0 0.0
    %101 = vmatpush1.msra.mxu0 %v41
    %102 = vmatprep.subr.mxu0 0.0
    %103 = vmatpush1.msra.mxu0 %v42
    %104 = vmatprep.subr.mxu0 0.0
    %105 = vmatpush1.msra.mxu0 %v43
    %106 = vmatprep.subr.mxu0 0.0
    %107 = vmatpush1.msra.mxu0 %v44
    %108 = vmatprep.subr.mxu0 0.0
    %109 = vmatpush1.msra.mxu0 %v45
    %110 = vmatprep.mubr.f32.mxu0 %v13
    %111 = vmatmul.mubr.f32.gmra.mrb[0].mxu0 %v12
    %v112 = vpop.f32.mrb[0].mxu0
    %v113 = vadd.f32 0.0, %v112
    %v114 = vpop.f32.mrb[0].mxu0
    %115 = vdwg.mxu0
    %vm116 = vcmask 900096
    %117 = vst.msk [vmem:[#allocation2] sm:$0xff] %vm116, %v113
    // Predicated region
    $region10: #{tpu_custom_call.1} parent=1 // pred_check
      _
    $region11: #{tpu_custom_call.1} parent=1 // pred_check_branch
      %119 = sbr.rel (0) target = $region13
    $region12: #{tpu_custom_call.1} parent=1 // pred_region
      %s121 = ssub.s32 128, 128
      %122 = vsyncadd [#allocation3], %s121
      %s124 = sshll.u32 [#allocation2], 4
      %s125 = int_to_ptr.vmem [resolvable:$true] %s124
      %127 = dma.vmem_to_hbm [thread:$0]  %s125, 128, %s2, [#allocation3]
    $region13: #{tpu_custom_call.1} parent=1 // pred_fallthru
      _
    // Predicated region
    $region14: #{tpu_custom_call.1} parent=1 // pred_check
      _
    $region15: #{tpu_custom_call.1} parent=1 // pred_check_branch
      %129 = sbr.rel (0) target = $region17
    $region16: #{tpu_custom_call.1} parent=1 // pred_region
      %130 = dma.done [#allocation3], 128
    $region17: #{tpu_custom_call.1} parent=1 // pred_fallthru
      _
    %131 = vsyncpa [#allocation3], 1

</llo_original>
